<compile_context>
chip_gen: v5e
topology: v5e:2x2
jax: 0.10.0
libtpu: 0.0.40
codegen_flags: <defaults>
</compile_context>

<pallas_src>
import functools

import jax
import jax.numpy as jnp
from jax.experimental import pallas as pl
from jax.experimental.pallas import tpu as pltpu


# ------------------------------ tiling helpers ------------------------------ #

def _choose_tile(dim, target, align):
    """Largest tile <= target that divides dim (multiple of align), else full dim."""
    if dim <= target:
        return dim
    t = target
    while t >= align:
        if dim % t == 0:
            return t
        t -= align
    return dim


# ----------------------------- Pallas kernels ------------------------------ #

def _matmul_kernel(*refs, scale, relu, has_bias):
    if has_bias:
        a_ref, w_ref, b_ref, o_ref, acc_ref = refs
    else:
        a_ref, w_ref, o_ref, acc_ref = refs
        b_ref = None

    @pl.when(pl.program_id(2) == 0)
    def _():
        acc_ref[...] = jnp.zeros_like(acc_ref)

    # bf16 MXU inputs, f32 accumulation.
    acc_ref[...] += jnp.dot(a_ref[...].astype(jnp.bfloat16), w_ref[...],
                            preferred_element_type=jnp.float32)

    @pl.when(pl.program_id(2) == pl.num_programs(2) - 1)
    def _():
        out = acc_ref[...] * scale
        if b_ref is not None:
            out = out + b_ref[...]
        if relu:
            out = jnp.maximum(out, 0.0)
        o_ref[...] = out.astype(o_ref.dtype)


def pallas_linear(a, w, bias=None, scale=1.0, relu=False,
                  tm_target=256, tn_target=256, tk_target=512):
    """y = relu?( (a @ w) * scale + bias ).  Tiled, pipelined, bf16 MXU matmul."""
    M, K = a.shape
    K2, N = w.shape
    assert K == K2
    tm = _choose_tile(M, tm_target, 8)
    tn = _choose_tile(N, tn_target, 128)
    tk = _choose_tile(K, tk_target, 128)
    grid = (M // tm, N // tn, K // tk)

    in_specs = [
        pl.BlockSpec((tm, tk), lambda i, j, kk: (i, kk)),
        pl.BlockSpec((tk, tn), lambda i, j, kk: (kk, j)),
    ]
    args = [a, w.astype(jnp.bfloat16)]
    if bias is not None:
        in_specs.append(pl.BlockSpec((1, tn), lambda i, j, kk: (0, j)))
        args.append(bias.reshape(1, N).astype(jnp.float32))

    return pl.pallas_call(
        functools.partial(_matmul_kernel, scale=float(scale), relu=relu,
                          has_bias=bias is not None),
        out_shape=jax.ShapeDtypeStruct((M, N), jnp.float32),
        grid=grid,
        in_specs=in_specs,
        out_specs=pl.BlockSpec((tm, tn), lambda i, j, kk: (i, j)),
        scratch_shapes=[pltpu.VMEM((tm, tn), jnp.float32)],
        compiler_params=pltpu.CompilerParams(
            dimension_semantics=("parallel", "parallel", "arbitrary")),
    )(*args)


def _add_ln_mask_kernel(x_ref, y_ref, g_ref, b_ref, m_ref, o_ref, *, eps):
    s = x_ref[...] + y_ref[...]
    mean = jnp.mean(s, axis=-1, keepdims=True)
    var = jnp.mean(jnp.square(s - mean), axis=-1, keepdims=True)
    o_ref[...] = (((s - mean) * jax.lax.rsqrt(var + eps)) * g_ref[...]
                  + b_ref[...]) * m_ref[...]


def pallas_add_ln_mask(x, y, gamma, beta, mask, eps=1e-5):
    """LayerNorm(x + y) * mask  — fused residual / LN / non-pad masking."""
    M, D = x.shape
    tm = _choose_tile(M, 512, 8)
    return pl.pallas_call(
        functools.partial(_add_ln_mask_kernel, eps=float(eps)),
        out_shape=jax.ShapeDtypeStruct((M, D), jnp.float32),
        grid=(M // tm,),
        in_specs=[
            pl.BlockSpec((tm, D), lambda i: (i, 0)),
            pl.BlockSpec((tm, D), lambda i: (i, 0)),
            pl.BlockSpec((1, D), lambda i: (0, 0)),
            pl.BlockSpec((1, D), lambda i: (0, 0)),
            pl.BlockSpec((tm, 1), lambda i: (i, 0)),
        ],
        out_specs=pl.BlockSpec((tm, D), lambda i: (i, 0)),
        compiler_params=pltpu.CompilerParams(dimension_semantics=("parallel",)),
    )(x, y, gamma.reshape(1, D).astype(jnp.float32),
      beta.reshape(1, D).astype(jnp.float32), mask)


def _rel_attn_kernel(q_ref, k_ref, v_ref, p_ref, cb_ref, pb_ref, kp_ref, o_ref,
                     *, scale):
    q = q_ref[0]            # (H, L, Dv) f32
    k = k_ref[0]            # (H, L, Dv)
    v = v_ref[0]            # (H, L, Dv)
    pos = p_ref[...]        # (H, L, Dv)
    cb = cb_ref[...]        # (H, 1, Dv)
    pb = pb_ref[...]        # (H, 1, Dv)

    qc = (q + cb).astype(jnp.bfloat16)
    qp = (q + pb).astype(jnp.bfloat16)
    kb = k.astype(jnp.bfloat16)
    posb = pos.astype(jnp.bfloat16)

    # Contract on the last dim of both operands — no explicit transpose.
    ac = jnp.einsum('hqd,hkd->hqk', qc, kb, preferred_element_type=jnp.float32)
    bd = jnp.einsum('hqd,hkd->hqk', qp, posb, preferred_element_type=jnp.float32)
    s = (ac + bd) * scale                                    # (H, L, L) f32

    L = s.shape[-1]
    row = jax.lax.broadcasted_iota(jnp.int32, (1, L, L), 1)
    col = jax.lax.broadcasted_iota(jnp.int32, (1, L, L), 2)
    kp = kp_ref[...]                                          # (1, 1, L) f32, 1 = pad
    masked = jnp.logical_or(col > row, kp > 0.5)              # (1, L, L)
    s = s + jnp.where(masked, -1e30, 0.0)                     # additive mask, f32

    m = jnp.max(s, axis=-1, keepdims=True)
    e = jnp.exp(s - m)
    denom = jnp.sum(e, axis=-1, keepdims=True)
    attn = e * pl.reciprocal(denom, approx=True)
    o = jnp.einsum('hqk,hkd->hqd', attn.astype(jnp.bfloat16),
                   v.astype(jnp.bfloat16), preferred_element_type=jnp.float32)
    o_ref[0] = o.astype(o_ref.dtype)


def pallas_rel_attention(q, k, v, pos, cb, pb, keypad, scale):
    """Relative multi-head attention; grid over batch, heads batched in-kernel."""
    B, H, L, Dv = q.shape
    return pl.pallas_call(
        functools.partial(_rel_attn_kernel, scale=float(scale)),
        out_shape=jax.ShapeDtypeStruct((B, H, L, Dv), jnp.float32),
        grid=(B,),
        in_specs=[
            pl.BlockSpec((1, H, L, Dv), lambda b: (b, 0, 0, 0)),   # q
            pl.BlockSpec((1, H, L, Dv), lambda b: (b, 0, 0, 0)),   # k
            pl.BlockSpec((1, H, L, Dv), lambda b: (b, 0, 0, 0)),   # v
            pl.BlockSpec((H, L, Dv), lambda b: (0, 0, 0)),         # positional keys
            pl.BlockSpec((H, 1, Dv), lambda b: (0, 0, 0)),         # content bias
            pl.BlockSpec((H, 1, Dv), lambda b: (0, 0, 0)),         # position bias
            pl.BlockSpec((1, 1, L), lambda b: (b, 0, 0)),          # key-pad vector
        ],
        out_specs=pl.BlockSpec((1, H, L, Dv), lambda b: (b, 0, 0, 0)),
        compiler_params=pltpu.CompilerParams(dimension_semantics=("parallel",)),
    )(q, k, v, pos, cb, pb, keypad)


# ----------------------------- parameter init ------------------------------ #

def _xavier_std(fan_in, fan_out):
    return (2.0 / (fan_in + fan_out)) ** 0.5


def init_transformer_xl(key, dict_size, n_topics, n_blocks, n_steps, n_head,
                        d_model, k, max_len):
    d_v = d_model // n_head * k
    d_ff = 4 * d_model
    hd = n_head * d_v
    keys = jax.random.split(key, 8)
    params = {}

    # tied embedding / output matrix  (torch normal_(std=0.2) overwrites the pad row)
    vocab_emb = 0.2 * jax.random.normal(keys[0], (dict_size + 1, d_model), jnp.float32)
    params["vocab_emb"] = vocab_emb
    # pre-transposed, bf16 copy for the logits projection (tied weight, no per-call .T)
    params["vocab_emb_T"] = vocab_emb.T.astype(jnp.bfloat16)

    bias_std = _xavier_std(d_v, hd)
    params["content_bias"] = bias_std * jax.random.normal(
        keys[1], (n_head, 1, d_v), jnp.float32)
    params["position_bias"] = bias_std * jax.random.normal(
        keys[2], (n_head, 1, d_v), jnp.float32)
    params["cond_w"] = (_xavier_std(n_topics, d_model) * jax.random.normal(
        keys[3], (n_topics, d_model), jnp.float32)).astype(jnp.bfloat16)
    params["cond_b"] = jnp.zeros((d_model,), jnp.float32)

    def w(key_, shp):
        return _xavier_std(shp[0], shp[1]) * jax.random.normal(key_, shp, jnp.float32)

    blocks = []
    bkey = keys[4]
    for _ in range(n_blocks):
        steps = []
        for _ in range(n_steps):
            bkey, *sk = jax.random.split(bkey, 9)
            wq, wk, wv = w(sk[0], (d_model, hd)), w(sk[1], (d_model, hd)), w(sk[2], (d_model, hd))
            steps.append({
                # fused QKV projection weight, stored bf16
                "Wqkv": jnp.concatenate([wq, wk, wv], axis=1).astype(jnp.bfloat16),
                "bqkv": jnp.zeros((3 * hd,), jnp.float32),
                "Wo": w(sk[3], (hd, d_model)).astype(jnp.bfloat16),
                "bo": jnp.zeros((d_model,), jnp.float32),
                "pos": 0.02 * jax.random.normal(sk[4], (n_head, max_len, d_v), jnp.float32),
                "ln1_g": jnp.ones((d_model,), jnp.float32),
                "ln1_b": jnp.zeros((d_model,), jnp.float32),
                "ln2_g": jnp.ones((d_model,), jnp.float32),
                "ln2_b": jnp.zeros((d_model,), jnp.float32),
                "W1": w(sk[5], (d_model, d_ff)).astype(jnp.bfloat16),
                "b1": jnp.zeros((d_ff,), jnp.float32),
                "W2": w(sk[6], (d_ff, d_model)).astype(jnp.bfloat16),
                "b2": jnp.zeros((d_model,), jnp.float32),
            })
        blocks.append(steps)
    params["blocks"] = blocks
    return params


# ------------------------------- forward pass ------------------------------ #

def _xl_layer(p, hidden, cb, pb, non_pad_flat, keypad, n_head, d_v):
    B, L, D = hidden.shape
    hd = n_head * d_v
    x = hidden.reshape(B * L, D)

    # fused Q/K/V projection
    qkv = pallas_linear(x, p["Wqkv"], p["bqkv"])                 # (B*L, 3*hd)
    qkv = qkv.reshape(B, L, 3, n_head, d_v)
    q = qkv[:, :, 0].transpose(0, 2, 1, 3)                       # (B, H, L, Dv)
    kk = qkv[:, :, 1].transpose(0, 2, 1, 3)
    v = qkv[:, :, 2].transpose(0, 2, 1, 3)
    pos = p["pos"][:, :L, :]

    attn = pallas_rel_attention(q, kk, v, pos, cb, pb, keypad, d_v ** (-0.5))
    attn = attn.transpose(0, 2, 1, 3).reshape(B * L, hd)
    o = pallas_linear(attn, p["Wo"], p["bo"])

    # fused residual + LayerNorm + non-pad masking
    h = pallas_add_ln_mask(x, o, p["ln1_g"], p["ln1_b"], non_pad_flat)
    ff = pallas_linear(h, p["W1"], p["b1"], relu=True)
    ff = pallas_linear(ff, p["W2"], p["b2"])
    h2 = pallas_add_ln_mask(h, ff, p["ln2_g"], p["ln2_b"], non_pad_flat)
    return h2.reshape(B, L, D)


def transformer_xl_forward(params, input_ids, *, pad_idx, n_head, d_model, k,
                           condition=None, memory=None):
    B, L = input_ids.shape
    d_v = d_model // n_head * k

    hidden = params["vocab_emb"][input_ids]                               # (B, L, D)
    non_pad_flat = (input_ids != pad_idx).astype(jnp.float32).reshape(B * L, 1)
    keypad = (input_ids == pad_idx).astype(jnp.float32).reshape(B, 1, L)   # 1 = pad

    new_memory = []
    for steps in params["blocks"]:
        step_mems = []
        for sp in steps:
            step_mems.append(hidden)          # memory = per-step hidden state
            hidden = _xl_layer(sp, hidden, params["content_bias"],
                               params["position_bias"], non_pad_flat, keypad,
                               n_head, d_v)
        new_memory.append(step_mems)

    if condition is not None:
        n_topics = condition.shape[-1]
        cond = pallas_linear(condition.reshape(-1, n_topics).astype(jnp.float32),
                             params["cond_w"], params["cond_b"])
        hidden = hidden + cond.reshape(condition.shape[:-1] + (d_model,))

    flat = hidden.reshape(B * L, d_model)
    logits = pallas_linear(flat, params["vocab_emb_T"], scale=d_model ** (-0.5))
    logits = logits.reshape(B, L, -1)

    # detach_mem equivalent
    new_memory = [[jax.lax.stop_gradient(m) for m in blk] for blk in new_memory]
    return logits, new_memory


# ----------------------------------- main ----------------------------------- #

if __name__ == "__main__":
    dict_size, n_topics, bos_idx, pad_idx = 50, 4, 1, 0
    n_blocks, n_steps, n_head, d_model, kmul = 2, 2, 4, 32, 1
    B, L = 2, 8

    root = jax.random.PRNGKey(0)
    pkey, ikey, ckey = jax.random.split(root, 3)

    params = init_transformer_xl(pkey, dict_size, n_topics, n_blocks, n_steps,
                                 n_head, d_model, kmul, max_len=L)

    ids = jax.random.randint(ikey, (B, L), 2, dict_size + 1).astype(jnp.int32)
    ids = ids.at[:, 0].set(bos_idx)
    ids = ids.at[1, -2:].set(pad_idx)            # padding to exercise the masks
    condition = jax.random.normal(ckey, (B, 1, n_topics), jnp.float32)

    logits, new_mem = transformer_xl_forward(
        params, ids, pad_idx=pad_idx, n_head=n_head, d_model=d_model, k=kmul,
        condition=condition)
    jax.block_until_ready(logits)

    assert logits.shape == (B, L, dict_size + 1)
    assert len(new_mem) == n_blocks and len(new_mem[0]) == n_steps
    assert new_mem[0][0].shape == (B, L, d_model)
    assert bool(jnp.all(jnp.isfinite(logits)))
    print("KERNEL_OK")
</pallas_src>

<mosaic_0001>
module attributes {stable_mosaic.version = 11 : i64} {
  func.func @_matmul_kernel(%arg0: i32, %arg1: i32, %arg2: i32, %arg3: memref<16x32xf32, #tpu.memory_space<vmem>>, %arg4: memref<32x96xbf16, #tpu.memory_space<vmem>>, %arg5: memref<1x96xf32, #tpu.memory_space<vmem>>, %arg6: memref<16x96xf32, #tpu.memory_space<vmem>>, %arg7: memref<16x96xf32, #tpu.memory_space<vmem>>) attributes {dimension_semantics = [#tpu.dimension_semantics<parallel>, #tpu.dimension_semantics<parallel>, #tpu.dimension_semantics<arbitrary>], iteration_bounds = array<i64: 1, 1, 1>, scalar_prefetch = 0 : i64, scratch_operands = 1 : i64, tpu.core_type = #tpu.core_type<tc>, window_params = [{transform_indices = @transform_0, window_bounds = array<i64: 16, 32>}, {transform_indices = @transform_1, window_bounds = array<i64: 32, 96>}, {transform_indices = @transform_2, window_bounds = array<i64: 1, 96>}, {transform_indices = @transform_3, window_bounds = array<i64: 16, 96>}]} {
    %c0_i32 = arith.constant 0 : i32
    %0 = arith.cmpi eq, %arg2, %c0_i32 : i32
    %1 = arith.extui %0 : i1 to i32
    %c0_i32_0 = arith.constant 0 : i32
    %2 = arith.cmpi ne, %1, %c0_i32_0 : i32
    scf.if %2 {
      %cst_10 = arith.constant 0.000000e+00 : f32
      %13 = vector.broadcast %cst_10 : f32 to vector<16x96xf32>
      %c0_11 = arith.constant 0 : index
      %c0_12 = arith.constant 0 : index
      %14 = vector.load %arg7[%c0_11, %c0_12] : memref<16x96xf32, #tpu.memory_space<vmem>>, vector<16x96xf32>
      tpu.vector_store %arg7[%c0_11, %c0_12], %13 {strides = array<i32>} : memref<16x96xf32, #tpu.memory_space<vmem>>, vector<16x96xf32>,
    } else {
    }
    %c0 = arith.constant 0 : index
    %c0_1 = arith.constant 0 : index
    %3 = vector.load %arg7[%c0, %c0_1] : memref<16x96xf32, #tpu.memory_space<vmem>>, vector<16x96xf32>
    %c0_2 = arith.constant 0 : index
    %c0_3 = arith.constant 0 : index
    %4 = vector.load %arg3[%c0_2, %c0_3] : memref<16x32xf32, #tpu.memory_space<vmem>>, vector<16x32xf32>
    %5 = arith.truncf %4 : vector<16x32xf32> to vector<16x32xbf16>
    %c0_4 = arith.constant 0 : index
    %c0_5 = arith.constant 0 : index
    %6 = vector.load %arg4[%c0_4, %c0_5] : memref<32x96xbf16, #tpu.memory_space<vmem>>, vector<32x96xbf16>
    %cst = arith.constant dense<0.000000e+00> : vector<16x96xf32>
    %7 = tpu.matmul %5, %6, %cst {dimension_numbers = #tpu.dot_dimension_numbers<[1], [0], [0], [1], [0, 0, 1, 1], [], []>} : vector<16x32xbf16>, vector<32x96xbf16>, vector<16x96xf32> -> vector<16x96xf32>
    %8 = arith.addf %3, %7 : vector<16x96xf32>
    %c0_6 = arith.constant 0 : index
    %c0_7 = arith.constant 0 : index
    %9 = vector.load %arg7[%c0_6, %c0_7] : memref<16x96xf32, #tpu.memory_space<vmem>>, vector<16x96xf32>
    tpu.vector_store %arg7[%c0_6, %c0_7], %8 {strides = array<i32>} : memref<16x96xf32, #tpu.memory_space<vmem>>, vector<16x96xf32>,
    %c0_i32_8 = arith.constant 0 : i32
    %10 = arith.cmpi eq, %arg2, %c0_i32_8 : i32
    %11 = arith.extui %10 : i1 to i32
    %c0_i32_9 = arith.constant 0 : i32
    %12 = arith.cmpi ne, %11, %c0_i32_9 : i32
    scf.if %12 {
      %c0_10 = arith.constant 0 : index
      %c0_11 = arith.constant 0 : index
      %13 = vector.load %arg7[%c0_10, %c0_11] : memref<16x96xf32, #tpu.memory_space<vmem>>, vector<16x96xf32>
      %cst_12 = arith.constant 1.000000e+00 : f32
      %14 = vector.broadcast %cst_12 : f32 to vector<16x96xf32>
      %15 = arith.mulf %13, %14 : vector<16x96xf32>
      %c0_13 = arith.constant 0 : index
      %c0_14 = arith.constant 0 : index
      %16 = vector.load %arg5[%c0_13, %c0_14] : memref<1x96xf32, #tpu.memory_space<vmem>>, vector<1x96xf32>
      %17 = vector.broadcast %16 : vector<1x96xf32> to vector<16x96xf32>
      %18 = arith.addf %15, %17 : vector<16x96xf32>
      %c0_15 = arith.constant 0 : index
      %c0_16 = arith.constant 0 : index
      %19 = vector.load %arg6[%c0_15, %c0_16] : memref<16x96xf32, #tpu.memory_space<vmem>>, vector<16x96xf32>
      tpu.vector_store %arg6[%c0_15, %c0_16], %18 {strides = array<i32>} : memref<16x96xf32, #tpu.memory_space<vmem>>, vector<16x96xf32>,
    } else {
    }
    return
  }
  func.func @transform_0(%arg0: i32, %arg1: i32, %arg2: i32) -> (i32, i32) {
    %c0_i32 = arith.constant 0 : i32
    return %arg0, %arg2 : i32, i32
  }
  func.func @transform_1(%arg0: i32, %arg1: i32, %arg2: i32) -> (i32, i32) {
    %c0_i32 = arith.constant 0 : i32
    return %arg2, %arg1 : i32, i32
  }
  func.func @transform_2(%arg0: i32, %arg1: i32, %arg2: i32) -> (i32, i32) {
    %c0_i32 = arith.constant 0 : i32
    %c0_i32_0 = arith.constant 0 : i32
    return %c0_i32, %arg1 : i32, i32
  }
  func.func @transform_3(%arg0: i32, %arg1: i32, %arg2: i32) -> (i32, i32) {
    %c0_i32 = arith.constant 0 : i32
    return %arg0, %arg1 : i32, i32
  }
}

</mosaic_0001>

<llo_original>
// kernel: tpu_custom_call.1
$region0: #{tpu_custom_call.1}
  #allocation0 [shape = 'u32[]', space=smem, size = 0x4, offset = 0x4, fixed_abs, tag = 'smem constant byte address 0x4 - core index']
  #allocation1 [shape = 'u32[72,128]{1,0:T(1,128)}', space=vmem, size = 0x9000, scoped, tag = 'internal scratch']
  #allocation2 [shape = 'f32[16,96]{1,0:T(8,128)}', space=vmem, size = 0x2000, scoped, tag = 'scratch operand']
  %s0 = inlined_call_operand.hbm [shape: f32[16,32], index: 0, kind: input, shape index: {}]
  %s1 = inlined_call_operand.hbm [shape: bf16[32,96], index: 1, kind: input, shape index: {}]
  %s2 = inlined_call_operand.vmem [shape: f32[1,96], index: 2, kind: input, shape index: {}]
  %s3 = inlined_call_operand.hbm [shape: f32[16,96], index: 3, kind: output, shape index: {}]
  %s4 = sld [smem:[#allocation0]]
  $region38: #{tpu_custom_call.1} parent=0
    _
  %s6 = ssub.s32 1, %s4
  %s7 = scalar_select 0, %s6, %s4
  $region1: #{tpu_custom_call.1} parent=0
    #allocation3 [shape = 'u8[8192]{0}', space=vmem, size = 0x2000, scoped, tag = 'input window, operand 0, single buffered']
    #allocation4 [shape = 's32[1]{0}', space=sflag, size = 0x4, scoped, tag = 'scoped memory for tpu_custom_call.1']
    #allocation5 [shape = 's32[1]{0}', space=sflag, size = 0x4, scoped, tag = 'scoped memory for tpu_custom_call.1']
    #allocation6 [shape = 'u8[8192]{0}', space=vmem, size = 0x2000, scoped, tag = 'input window, operand 1, single buffered']
    #allocation7 [shape = 's32[1]{0}', space=sflag, size = 0x4, scoped, tag = 'scoped memory for tpu_custom_call.1']
    #allocation8 [shape = 'u8[8192]{0}', space=vmem, size = 0x2000, scoped, tag = 'output window, operand 0, single buffered']
    %8 = vsyncpa [#allocation4], 0
    %9 = vsyncpa [#allocation7], 0
    %10 = vsyncpa [#allocation5], 0
    // Predicated region
    $region2: #{tpu_custom_call.1} parent=1 // pred_check
      _
    $region3: #{tpu_custom_call.1} parent=1 // pred_check_branch
      %12 = sbr.rel (0) target = $region5
    $region4: #{tpu_custom_call.1} parent=1 // pred_region
      %14 = vsyncadd [#allocation4], 0
      %s15 = sshll.u32 %s0, 4
      %s16 = int_to_ptr.hbm [resolvable:$true] %s15
      %s17 = sshll.u32 [#allocation3], 4
      %s18 = int_to_ptr.vmem [resolvable:$true] %s17
      %23 = dma.hbm_to_vmem [thread:$0]  %s16, 256, %s18, [#allocation4], 128, 128, 8
    $region5: #{tpu_custom_call.1} parent=1 // pred_fallthru
      _
    // Predicated region
    $region6: #{tpu_custom_call.1} parent=1 // pred_check
      _
    $region7: #{tpu_custom_call.1} parent=1 // pred_check_branch
      %25 = sbr.rel (0) target = $region9
    $region8: #{tpu_custom_call.1} parent=1 // pred_region
      %27 = vsyncadd [#allocation7], 0
      %s28 = sshll.u32 %s1, 4
      %s29 = int_to_ptr.hbm [resolvable:$true] %s28
      %s30 = sshll.u32 [#allocation6], 4
      %s31 = int_to_ptr.vmem [resolvable:$true] %s30
      %36 = dma.hbm_to_vmem [thread:$0]  %s29, 256, %s31, [#allocation7], 64, 64, 4
    $region9: #{tpu_custom_call.1} parent=1 // pred_fallthru
      _
    // Predicated region
    $region10: #{tpu_custom_call.1} parent=1 // pred_check
      _
    $region11: #{tpu_custom_call.1} parent=1 // pred_check_branch
      %38 = sbr.rel (0) target = $region13
    $region12: #{tpu_custom_call.1} parent=1 // pred_region
      _
    $region13: #{tpu_custom_call.1} parent=1 // pred_fallthru
      _
    // Predicated region
    $region14: #{tpu_custom_call.1} parent=1 // pred_check
      _
    $region15: #{tpu_custom_call.1} parent=1 // pred_check_branch
      %40 = sbr.rel (0) target = $region17
    $region16: #{tpu_custom_call.1} parent=1 // pred_region
      %42 = dma.done [#allocation4], 256
    $region17: #{tpu_custom_call.1} parent=1 // pred_fallthru
      _
    // Predicated region
    $region18: #{tpu_custom_call.1} parent=1 // pred_check
      _
    $region19: #{tpu_custom_call.1} parent=1 // pred_check_branch
      %44 = sbr.rel (0) target = $region21
    $region20: #{tpu_custom_call.1} parent=1 // pred_region
      %46 = dma.done [#allocation7], 256
    $region21: #{tpu_custom_call.1} parent=1 // pred_fallthru
      _
    %p48 = scmp.eq.s32.totalorder 0, 0
    // Predicated region
    $region22: #{tpu_custom_call.1} parent=1 // pred_check
      %p49 = pneg %p48
    $region23: #{tpu_custom_call.1} parent=1 // pred_check_branch
      %51 = sbr.rel (%p49) target = $region25
    $region24: #{tpu_custom_call.1} parent=1 // pred_region
      %vm52 = vcmask 785408
      %53 = vst.msk [vmem:[#allocation2] sm:$0xff] %vm52, 0.0
      %54 = vst.msk [vmem:[#allocation2 + $0x8] sm:$0xff] %vm52, 0.0
    $region25: #{tpu_custom_call.1} parent=1 // pred_fallthru
      _
    %v55 = vld [vmem:[#allocation2] sm:$0xff]
    %v56 = vld [vmem:[#allocation2 + $0x8] sm:$0xff]
    %v57 = vld [vmem:[#allocation3] sm:$0xff]
    %v58 = vld [vmem:[#allocation3 + $0x8] sm:$0xff]
    %v59 = vpack.c.bf16 %v58, %v57
    %v60 = vld [vmem:[#allocation6] sm:$0xf]
    %v61 = vld [vmem:[#allocation6 + $0x4] sm:$0xf]
    %v62 = vld [vmem:[#allocation6 + $0x8] sm:$0xf]
    %v63 = vld [vmem:[#allocation6 + $0xc] sm:$0xf]
    %v68 = vunpack.c.l.b16 %v60
    %v69 = vunpack.c.l.b16 %v61
    %v70 = vunpack.c.l.b16 %v62
    %v71 = vunpack.c.l.b16 %v63
    %v72 = vpack.c.b16 %v69, %v68
    %v73 = vpack.c.b16 %v71, %v70
    %vm76 = vcmask 261120
    %v78 = vsel %vm76, %v59, 0
    %80 = vmatpush.bf16.msra.mxu0 0
    %81 = vmatpush.bf16.msra.mxu0 0
    %82 = vmatpush.bf16.msra.mxu0 0
    %83 = vmatpush.bf16.msra.mxu0 0
    %84 = vmatpush.bf16.msra.mxu0 0
    %85 = vmatpush.bf16.msra.mxu0 0
    %86 = vmatpush.bf16.msra.mxu0 %v73
    %87 = vmatpush.bf16.msra.mxu0 %v72
    %88 = vmatmul.bf16.gmra.mxu0 %v78
    %v89 = vpop.f32.mrf.mxu0
    %v90 = vadd.f32 0.0, %v89
    %v91 = vpop.f32.mrf.mxu0
    %v92 = vadd.f32 0.0, %v91
    %93 = vdwg.mxu0
    %v94 = vadd.f32 %v55, %v90
    %v95 = vadd.f32 %v56, %v92
    %vm96 = vcmask 785408
    %97 = vst.msk [vmem:[#allocation2] sm:$0xff] %vm96, %v94
    %98 = vst.msk [vmem:[#allocation2 + $0x8] sm:$0xff] %vm96, %v95
    // Predicated region
    $region26: #{tpu_custom_call.1} parent=1 // pred_check
      %p99 = pneg %p48
    $region27: #{tpu_custom_call.1} parent=1 // pred_check_branch
      %101 = sbr.rel (%p99) target = $region29
    $region28: #{tpu_custom_call.1} parent=1 // pred_region
      %v102 = vld [vmem:[#allocation2] sm:$0xff]
      %v103 = vld [vmem:[#allocation2 + $0x8] sm:$0xff]
      %v104 = vld [vmem:[%s2] sm:$0x1]
      %v106 = vperm.slane %v104, 0
      %v108 = vadd.f32 %v102, %v106
      %v109 = vadd.f32 %v103, %v106
      %110 = vst.msk [vmem:[#allocation8] sm:$0xff] %vm96, %v108
      %111 = vst.msk [vmem:[#allocation8 + $0x8] sm:$0xff] %vm96, %v109
    $region29: #{tpu_custom_call.1} parent=1 // pred_fallthru
      _
    // Predicated region
    $region30: #{tpu_custom_call.1} parent=1 // pred_check
      _
    $region31: #{tpu_custom_call.1} parent=1 // pred_check_branch
      %113 = sbr.rel (0) target = $region33
    $region32: #{tpu_custom_call.1} parent=1 // pred_region
      %115 = vsyncadd [#allocation5], 0
      %s116 = sshll.u32 [#allocation8], 4
      %s117 = int_to_ptr.vmem [resolvable:$true] %s116
      %s118 = sshll.u32 %s3, 4
      %s119 = int_to_ptr.hbm [resolvable:$true] %s118
      %124 = dma.vmem_to_hbm [thread:$0]  %s117, 256, %s119, [#allocation5], 128, 128, 8
    $region33: #{tpu_custom_call.1} parent=1 // pred_fallthru
      _
    // Predicated region
    $region34: #{tpu_custom_call.1} parent=1 // pred_check
      _
    $region35: #{tpu_custom_call.1} parent=1 // pred_check_branch
      %126 = sbr.rel (0) target = $region37
    $region36: #{tpu_custom_call.1} parent=1 // pred_region
      %128 = dma.done [#allocation5], 256
    $region37: #{tpu_custom_call.1} parent=1 // pred_fallthru
      _
    %129 = vsyncpa [#allocation4], 1
    %130 = vsyncpa [#allocation7], 1
    %131 = vsyncpa [#allocation5], 1

</llo_original>
